<compile_context>
chip_gen: v5e
topology: v5e:2x2
jax: 0.10.0
libtpu: 0.0.40
codegen_flags: <defaults>
</compile_context>

<pallas_src>
import functools
import math

import jax
import jax.numpy as jnp
from jax.experimental import pallas as pl
from jax.experimental.pallas import tpu as pltpu

_LOG_SQRT_2PI = 0.5 * math.log(2.0 * math.pi)


# ----------------------------------------------------------------------------
# Parameter setup (mirrors CtsLayer.__init__ / col_means / col_stds) — glue,
# plain JAX.  y is a binary {0,1} float vector.
# ----------------------------------------------------------------------------
def col_means(x, row_weights):
    x = x.astype(jnp.float32)
    w = row_weights.astype(jnp.float32)
    return jnp.sum(x * w[:, None], axis=0) / jnp.sum(w)


def col_stds(x, row_weights):
    x = x.astype(jnp.float32)
    w = row_weights.astype(jnp.float32)
    means = col_means(x, w)
    sq = (x - means[None, :]) ** 2 * w[:, None]
    # NOTE: PyTorch reference uses row_weights.nonzero().sum() (sum of the
    # *indices* of nonzero rows) for m — reproduced exactly.
    idx = jnp.arange(x.shape[0], dtype=jnp.float32)
    m = jnp.sum(idx * (w != 0).astype(jnp.float32))
    denom = (m - 1.0) / m * jnp.sum(w)
    return jnp.sqrt(jnp.sum(sq, axis=0) / denom)


def cts_layer_init(x_cts, y):
    y = y.astype(jnp.float32)
    means = jnp.stack([col_means(x_cts, 1.0 - y), col_means(x_cts, y)], axis=0)
    stds = jnp.stack([col_stds(x_cts, 1.0 - y), col_stds(x_cts, y)], axis=0)
    return means, stds


# ----------------------------------------------------------------------------
# Pallas kernel: log-space lift + clamp + row-sum + single exp per row.
# Layout: x tile is (D, TN) — features on sublanes, rows on lanes.
# ----------------------------------------------------------------------------
def _cts_forward_kernel(x_ref, a_ref, b_ref, c_ref, o_ref, *, log_lo, log_hi):
    x = x_ref[...]                      # (D, TN) f32
    a = a_ref[...]                      # (D, 1)  f32
    b = b_ref[...]                      # (D, 1)  f32
    c = c_ref[...]                      # (D, 1)  f32

    # log( pdf(x; mu, sd) / pdf(x; 0, 1) ) as a quadratic in x — pure VPU.
    t = (a * x + b) * x + c             # (D, TN)

    # Clamp / NaN handling in log space (mirrors max(..., lower_lim) then
    # nan_to_num(nan=upper_lim, posinf=upper_lim) of the reference).
    t = jnp.maximum(t, jnp.float32(log_lo))                      # NaN propagates
    t = jnp.where(jnp.isnan(t) | (t == jnp.inf), jnp.float32(log_hi), t)

    # prod over features == exp(sum of logs): one exp per row, lane-dense store.
    o_ref[...] = jnp.exp(jnp.sum(t, axis=0, keepdims=True))      # (1, TN)


def cts_layer_forward(x, means, stds, c=1, lower_lim=1e-3, upper_lim=1e3,
                      tile_n=None):
    """x: (N, D) float.  Returns (N,) f32 of per-row products of lifts."""
    x = x.astype(jnp.float32)
    N, D = x.shape

    # Precompute per-feature quadratic coefficients (O(D), wrapper-side):
    #   t = 0.5*x^2 - 0.5*((x-mu)/sd)^2 - log(sd)  ==  (a*x + b)*x + c
    mu = means[c].astype(jnp.float32)
    sd = stds[c].astype(jnp.float32)
    inv_var = 1.0 / (sd * sd)
    coef_a = (0.5 * (1.0 - inv_var)).reshape(D, 1)
    coef_b = (mu * inv_var).reshape(D, 1)
    coef_c = (-0.5 * mu * mu * inv_var - jnp.log(sd)).reshape(D, 1)

    # Tile sizing: rows live on the lane axis.  Keep the double-buffered x
    # tile within ~8 MiB so it fits under scoped-VMEM defaults on
    # v5e (16 MiB) / v6e (32 MiB) / v7x (32 of 64 MiB physical).
    if tile_n is None:
        budget_bytes = 8 * 1024 * 1024
        cap = (budget_bytes // (2 * D * 4)) // 128 * 128
        cap = max(128, min(2048, cap))
        n_ceil = ((N + 127) // 128) * 128
        tile_n = min(cap, n_ceil)
    assert tile_n % 128 == 0
    n_pad = pl.cdiv(N, tile_n) * tile_n

    # Transposed + lane-padded input; padded lanes are sliced off at the end.
    xt = jnp.pad(x.T, ((0, 0), (0, n_pad - N)))                  # (D, n_pad)

    kernel = functools.partial(
        _cts_forward_kernel,
        log_lo=float(math.log(lower_lim)),
        log_hi=float(math.log(upper_lim)),
    )

    out = pl.pallas_call(
        kernel,
        out_shape=jax.ShapeDtypeStruct((1, n_pad), jnp.float32),
        grid_spec=pl.GridSpec(
            grid=(n_pad // tile_n,),
            in_specs=[
                pl.BlockSpec((D, tile_n), lambda i: (0, i)),     # x tile
                pl.BlockSpec((D, 1), lambda i: (0, 0)),          # a (resident)
                pl.BlockSpec((D, 1), lambda i: (0, 0)),          # b (resident)
                pl.BlockSpec((D, 1), lambda i: (0, 0)),          # c (resident)
            ],
            out_specs=pl.BlockSpec((1, tile_n), lambda i: (0, i)),  # lane-dense
        ),
        compiler_params=pltpu.CompilerParams(
            dimension_semantics=("parallel",)),
    )(xt, coef_a, coef_b, coef_c)
    return out[0, :N]


# ----------------------------------------------------------------------------
# Pure-JAX reference (elementwise, mirrors the PyTorch forward) for checking.
# ----------------------------------------------------------------------------
def cts_layer_forward_ref(x, means, stds, c=1, lower_lim=1e-3, upper_lim=1e3):
    x = x.astype(jnp.float32)
    mu = means[c][None, :]
    sd = stds[c][None, :]
    x_norm = jnp.exp(-0.5 * ((x - mu) / sd) ** 2 - jnp.log(sd) - _LOG_SQRT_2PI)
    x_std = jnp.exp(-0.5 * x * x - _LOG_SQRT_2PI)
    out = jnp.maximum(x_norm / x_std, lower_lim)
    out = jnp.where(jnp.isnan(out) | (out == jnp.inf), upper_lim, out)
    return jnp.prod(out, axis=1)


if __name__ == "__main__":
    key = jax.random.PRNGKey(0)
    k1, k2, k3 = jax.random.split(key, 3)

    N_train, N, D = 32, 16, 8
    lower_lim, upper_lim = 1e-3, 1e3

    # "Training" data used only to fit the per-class means/stds (__init__).
    x_cts = jax.random.normal(k1, (N_train, D), dtype=jnp.float32)
    y = (jax.random.uniform(k2, (N_train,)) > 0.5).astype(jnp.float32)
    means, stds = cts_layer_init(x_cts, y)

    # Forward input (0-1 standardized continuous features).
    x = jax.random.normal(k3, (N, D), dtype=jnp.float32)

    out = cts_layer_forward(x, means, stds, c=1,
                            lower_lim=lower_lim, upper_lim=upper_lim)
    out = jax.block_until_ready(out)

    ref = cts_layer_forward_ref(x, means, stds, c=1,
                                lower_lim=lower_lim, upper_lim=upper_lim)
    assert out.shape == (N,)
    assert jnp.allclose(out, ref, rtol=1e-4, atol=1e-5), (out, ref)

    print("KERNEL_OK")
</pallas_src>

<mosaic_0001>
module attributes {stable_mosaic.version = 11 : i64} {
  func.func @_cts_forward_kernel(%arg0: i32, %arg1: memref<8x128xf32, #tpu.memory_space<vmem>>, %arg2: memref<8x1xf32, #tpu.memory_space<vmem>>, %arg3: memref<8x1xf32, #tpu.memory_space<vmem>>, %arg4: memref<8x1xf32, #tpu.memory_space<vmem>>, %arg5: memref<1x128xf32, #tpu.memory_space<vmem>>) attributes {dimension_semantics = [#tpu.dimension_semantics<parallel>], iteration_bounds = array<i64: 1>, scalar_prefetch = 0 : i64, scratch_operands = 0 : i64, tpu.core_type = #tpu.core_type<tc>, window_params = [{transform_indices = @transform_0, window_bounds = array<i64: 8, 128>}, {pipeline_mode = #tpu.pipeline_mode<synchronous>, transform_indices = @transform_1, window_bounds = array<i64: 8, 1>}, {pipeline_mode = #tpu.pipeline_mode<synchronous>, transform_indices = @transform_2, window_bounds = array<i64: 8, 1>}, {pipeline_mode = #tpu.pipeline_mode<synchronous>, transform_indices = @transform_3, window_bounds = array<i64: 8, 1>}, {transform_indices = @transform_4, window_bounds = array<i64: 1, 128>}]} {
    %c0 = arith.constant 0 : index
    %c0_0 = arith.constant 0 : index
    %0 = vector.load %arg1[%c0, %c0_0] : memref<8x128xf32, #tpu.memory_space<vmem>>, vector<8x128xf32>
    %c0_1 = arith.constant 0 : index
    %c0_2 = arith.constant 0 : index
    %1 = vector.load %arg2[%c0_1, %c0_2] : memref<8x1xf32, #tpu.memory_space<vmem>>, vector<8x1xf32>
    %c0_3 = arith.constant 0 : index
    %c0_4 = arith.constant 0 : index
    %2 = vector.load %arg3[%c0_3, %c0_4] : memref<8x1xf32, #tpu.memory_space<vmem>>, vector<8x1xf32>
    %c0_5 = arith.constant 0 : index
    %c0_6 = arith.constant 0 : index
    %3 = vector.load %arg4[%c0_5, %c0_6] : memref<8x1xf32, #tpu.memory_space<vmem>>, vector<8x1xf32>
    %4 = vector.broadcast %1 : vector<8x1xf32> to vector<8x128xf32>
    %5 = arith.mulf %4, %0 : vector<8x128xf32>
    %6 = vector.broadcast %2 : vector<8x1xf32> to vector<8x128xf32>
    %7 = arith.addf %5, %6 : vector<8x128xf32>
    %8 = arith.mulf %7, %0 : vector<8x128xf32>
    %9 = vector.broadcast %3 : vector<8x1xf32> to vector<8x128xf32>
    %10 = arith.addf %8, %9 : vector<8x128xf32>
    %cst = arith.constant -6.90775537 : f32
    %11 = vector.broadcast %cst : f32 to vector<8x128xf32>
    %12 = arith.maximumf %10, %11 : vector<8x128xf32>
    %13 = arith.cmpf one, %12, %12 : vector<8x128xf32>
    %cst_7 = arith.constant 0x7F800000 : f32
    %14 = vector.broadcast %cst_7 : f32 to vector<8x128xf32>
    %15 = arith.cmpf oeq, %12, %14 : vector<8x128xf32>
    %16 = arith.ori %13, %15 : vector<8x128xi1>
    %cst_8 = arith.constant 6.90775537 : f32
    %17 = vector.broadcast %cst_8 : f32 to vector<8x128xf32>
    %18 = arith.select %16, %17, %12 : vector<8x128xi1>, vector<8x128xf32>
    %cst_9 = arith.constant dense<0.000000e+00> : vector<128xf32>
    %19 = vector.multi_reduction <add>, %18, %cst_9 [0] : vector<8x128xf32> to vector<128xf32>
    %20 = vector.shape_cast %19 : vector<128xf32> to vector<1x128xf32>
    %21 = math.exp %20 : vector<1x128xf32>
    %c0_10 = arith.constant 0 : index
    %c0_11 = arith.constant 0 : index
    %22 = vector.load %arg5[%c0_10, %c0_11] : memref<1x128xf32, #tpu.memory_space<vmem>>, vector<1x128xf32>
    tpu.vector_store %arg5[%c0_10, %c0_11], %21 {strides = array<i32>} : memref<1x128xf32, #tpu.memory_space<vmem>>, vector<1x128xf32>,
    return
  }
  func.func @transform_0(%arg0: i32) -> (i32, i32) {
    %c0_i32 = arith.constant 0 : i32
    %c0_i32_0 = arith.constant 0 : i32
    return %c0_i32, %arg0 : i32, i32
  }
  func.func @transform_1(%arg0: i32) -> (i32, i32) {
    %c0_i32 = arith.constant 0 : i32
    %c0_i32_0 = arith.constant 0 : i32
    %c0_i32_1 = arith.constant 0 : i32
    return %c0_i32, %c0_i32_0 : i32, i32
  }
  func.func @transform_2(%arg0: i32) -> (i32, i32) {
    %c0_i32 = arith.constant 0 : i32
    %c0_i32_0 = arith.constant 0 : i32
    %c0_i32_1 = arith.constant 0 : i32
    return %c0_i32, %c0_i32_0 : i32, i32
  }
  func.func @transform_3(%arg0: i32) -> (i32, i32) {
    %c0_i32 = arith.constant 0 : i32
    %c0_i32_0 = arith.constant 0 : i32
    %c0_i32_1 = arith.constant 0 : i32
    return %c0_i32, %c0_i32_0 : i32, i32
  }
  func.func @transform_4(%arg0: i32) -> (i32, i32) {
    %c0_i32 = arith.constant 0 : i32
    %c0_i32_0 = arith.constant 0 : i32
    return %c0_i32, %arg0 : i32, i32
  }
}

</mosaic_0001>

<llo_original>
// kernel: tpu_custom_call.1
$region0: #{tpu_custom_call.1}
  #allocation0 [shape = 'u32[]', space=smem, size = 0x4, offset = 0x4, fixed_abs, tag = 'smem constant byte address 0x4 - core index']
  #allocation1 [shape = 'u32[72,128]{1,0:T(1,128)}', space=vmem, size = 0x9000, scoped, tag = 'internal scratch']
  %s0 = inlined_call_operand.vmem [shape: f32[8,128], index: 0, kind: input, shape index: {}]
  %s1 = inlined_call_operand.vmem [shape: f32[8,1], index: 1, kind: input, shape index: {}]
  %s2 = inlined_call_operand.vmem [shape: f32[8,1], index: 2, kind: input, shape index: {}]
  %s3 = inlined_call_operand.vmem [shape: f32[8,1], index: 3, kind: input, shape index: {}]
  %s4 = inlined_call_operand.hbm [shape: f32[1,128], index: 4, kind: output, shape index: {}]
  %s5 = sld [smem:[#allocation0]]
  $region26: #{tpu_custom_call.1} parent=0
    _
  %s7 = ssub.s32 1, %s5
  %s8 = scalar_select 0, %s7, %s5
  $region1: #{tpu_custom_call.1} parent=0
    #allocation2 [shape = 'u8[512]{0}', space=vmem, size = 0x400, scoped, tag = 'output window, operand 0, single buffered']
    #allocation3 [shape = 's32[1]{0}', space=sflag, size = 0x4, scoped, tag = 'scoped memory for tpu_custom_call.1']
    %9 = vsyncpa [#allocation3], 0
    // Predicated region
    $region2: #{tpu_custom_call.1} parent=1 // pred_check
      _
    $region3: #{tpu_custom_call.1} parent=1 // pred_check_branch
      %11 = sbr.rel (0) target = $region5
    $region4: #{tpu_custom_call.1} parent=1 // pred_region
      _
    $region5: #{tpu_custom_call.1} parent=1 // pred_fallthru
      _
    // Predicated region
    $region6: #{tpu_custom_call.1} parent=1 // pred_check
      _
    $region7: #{tpu_custom_call.1} parent=1 // pred_check_branch
      %13 = sbr.rel (0) target = $region9
    $region8: #{tpu_custom_call.1} parent=1 // pred_region
      _
    $region9: #{tpu_custom_call.1} parent=1 // pred_fallthru
      _
    // Predicated region
    $region10: #{tpu_custom_call.1} parent=1 // pred_check
      _
    $region11: #{tpu_custom_call.1} parent=1 // pred_check_branch
      %15 = sbr.rel (0) target = $region13
    $region12: #{tpu_custom_call.1} parent=1 // pred_region
      _
    $region13: #{tpu_custom_call.1} parent=1 // pred_fallthru
      _
    // Predicated region
    $region14: #{tpu_custom_call.1} parent=1 // pred_check
      _
    $region15: #{tpu_custom_call.1} parent=1 // pred_check_branch
      %17 = sbr.rel (0) target = $region17
    $region16: #{tpu_custom_call.1} parent=1 // pred_region
      _
    $region17: #{tpu_custom_call.1} parent=1 // pred_fallthru
      _
    %v18 = vld [vmem:[%s0] sm:$0xff]
    %v19 = vld [vmem:[%s1] sm:$0xff]
    %v20 = vld [vmem:[%s2] sm:$0xff]
    %v21 = vld [vmem:[%s3] sm:$0xff]
    %23 = vset.pattern.permute.xlu0 0
    %24 = vperm.xlu0 %23, %v19
    %v25 = vpop.permute.xlu0 %24
    %v27 = vmul.f32 %v25, %v18
    %29 = vset.pattern.permute.xlu0 0
    %30 = vperm.xlu0 %29, %v20
    %v31 = vpop.permute.xlu0 %30
    %v33 = vadd.f32 %v27, %v31
    %v34 = vmul.f32 %v33, %v18
    %36 = vset.pattern.permute.xlu0 0
    %37 = vperm.xlu0 %36, %v21
    %v38 = vpop.permute.xlu0 %37
    %v40 = vadd.f32 %v34, %v38
    %v41 = vmax.f32 %v40, -6.9077554
    %vm42 = vcmp.ne.f32.partialorder %v41, %v41
    %vm43 = vcmp.eq.f32.partialorder %v41, inf
    %vm44 = vmor %vm42, %vm43
    %v45 = vsel %vm44, 6.9077554, %v41
    %v46 = vrot.slane %v45, 4
    %v47 = vadd.f32 %v45, %v46
    %v48 = vrot.slane %v47, 2
    %v49 = vadd.f32 %v47, %v48
    %v50 = vrot.slane %v49, 1
    %v51 = vadd.f32 %v49, %v50
    %v52 = vmul.f32 %v51, 1.442695
    %v53 = vpow.pop %v52
    %54 = vst [vmem:[#allocation2] sm:$0x1] %v53
    // Predicated region
    $region18: #{tpu_custom_call.1} parent=1 // pred_check
      _
    $region19: #{tpu_custom_call.1} parent=1 // pred_check_branch
      %56 = sbr.rel (0) target = $region21
    $region20: #{tpu_custom_call.1} parent=1 // pred_region
      %58 = vsyncadd [#allocation3], 0
      %s60 = sshll.u32 [#allocation2], 4
      %s61 = int_to_ptr.vmem [resolvable:$true] %s60
      %s62 = sshll.u32 %s4, 4
      %s63 = int_to_ptr.hbm [resolvable:$true] %s62
      %65 = dma.vmem_to_hbm [thread:$0]  %s61, 16, %s63, [#allocation3]
    $region21: #{tpu_custom_call.1} parent=1 // pred_fallthru
      _
    // Predicated region
    $region22: #{tpu_custom_call.1} parent=1 // pred_check
      _
    $region23: #{tpu_custom_call.1} parent=1 // pred_check_branch
      %67 = sbr.rel (0) target = $region25
    $region24: #{tpu_custom_call.1} parent=1 // pred_region
      %69 = dma.done [#allocation3], 16
    $region25: #{tpu_custom_call.1} parent=1 // pred_fallthru
      _
    %70 = vsyncpa [#allocation3], 1

</llo_original>
